<compile_context>
chip_gen: v6e
topology: v6e:2x2x1
jax: 0.10.0
libtpu: 0.0.40
codegen_flags: <defaults>
</compile_context>

<pallas_src>
import numpy as np
import jax
import jax.numpy as jnp
from jax.experimental import pallas as pl
from jax.experimental.pallas import tpu as pltpu


def _round_up(a, b):
    return (a + b - 1) // b * b


# ------------------------------- Pallas kernel -------------------------------

def _mish(v):
    # Mish(x) = x * tanh(softplus(x)) = x * t(t+2) / (t(t+2) + 2), t = exp(x).
    # Clamp before exp: for x >= 20 the ratio is 1.0 in f32 (exact), for very
    # negative x exp underflows to 0 -> 0.  The denominator is >= 2, so the
    # approx EUP reciprocal is safe and keeps this off the VALU.
    t = jnp.exp(jnp.minimum(v, 20.0))
    num = t * (t + 2.0)
    return v * num * pl.reciprocal(num + 2.0, approx=True)


def _csn_kernel(in_ref, fw2_ref, ph_ref,
                w0s_ref, w0e_ref, b0_ref, w1_ref, b1_ref, w2_ref, b2_ref,
                o_ref):
    md = w0s_ref.dtype                       # matmul operand dtype (bf16 / f32)

    slab = in_ref[...]                       # (TB, 128) f32: [sigma|x|cond|0]
    sigma = slab[:, 0:1]                     # (TB, 1)

    # Gaussian Fourier features in one transcendental pass:
    #   embed = sin(sigma*[W*2pi | W*2pi] + [0 | pi/2]) = [sin(p) | cos(p)]
    embed = jnp.sin(sigma * fw2_ref[...] + ph_ref[...])      # (TB, 2*half_e)

    # Layer 0: split-W0 two-dot formulation (no in-kernel lane concatenate).
    # w0s has a zero row for the sigma column and zero pad rows, so the slab
    # dot contributes exactly the x|cond part of layer 0.
    h = (jnp.dot(slab.astype(md), w0s_ref[...],
                 preferred_element_type=jnp.float32)
         + jnp.dot(embed.astype(md), w0e_ref[...],
                   preferred_element_type=jnp.float32)
         + b0_ref[...])
    h = _mish(h)

    # Layer 1 + Mish.
    h = _mish(jnp.dot(h.astype(md), w1_ref[...],
                      preferred_element_type=jnp.float32) + b1_ref[...])

    # Output head (lane-padded to Op; padding sliced off in the wrapper).
    o_ref[...] = (jnp.dot(h.astype(md), w2_ref[...],
                          preferred_element_type=jnp.float32) + b2_ref[...])


# --------------------------- one-time parameter prep --------------------------

def prepare_params(params, x_dim, cond_dim, *, matmul_dtype=jnp.bfloat16,
                   lane=128):
    """Transpose, split W0, 2*pi pre-scale, fused-sin phase row, lane padding
    and matmul-dtype cast — all hoisted out of the per-call path."""
    H = params["w0"].shape[0]
    O = params["w2"].shape[0]
    half_e = params["fourier_w"].shape[0]
    two_e = 2 * half_e
    IN = 1 + x_dim + cond_dim                # slab columns: [sigma | x | cond]
    INp = _round_up(IN, lane)
    Hp = _round_up(H, lane)
    Op = _round_up(O, lane)
    f32 = jnp.float32

    # PyTorch Linear weight is (out, in); kernel wants (in, out). Layer-0
    # input column order in the reference is [x, cond, sin, cos].
    w0_t = params["w0"].T.astype(f32)        # (x_dim + cond_dim + 2*half_e, H)

    # Slab-aligned part of W0: row 0 (sigma column) and pad rows stay zero.
    w0s = jnp.zeros((INp, Hp), f32)
    w0s = w0s.at[1:1 + x_dim, :H].set(w0_t[:x_dim])
    w0s = w0s.at[1 + x_dim:IN, :H].set(w0_t[x_dim:x_dim + cond_dim])
    # Embedding part of W0 (rows for [sin | cos]).
    w0e = jnp.zeros((two_e, Hp), f32).at[:, :H].set(w0_t[x_dim + cond_dim:])

    w1 = jnp.zeros((Hp, Hp), f32).at[:H, :H].set(params["w1"].T.astype(f32))
    w2 = jnp.zeros((Hp, Op), f32).at[:H, :O].set(params["w2"].T.astype(f32))
    b0 = jnp.zeros((1, Hp), f32).at[0, :H].set(params["b0"].astype(f32))
    b1 = jnp.zeros((1, Hp), f32).at[0, :H].set(params["b1"].astype(f32))
    b2 = jnp.zeros((1, Op), f32).at[0, :O].set(params["b2"].astype(f32))

    # Fused sin/cos: embed = sin(sigma * fw2 + phase).
    fw = params["fourier_w"].astype(f32) * (2.0 * np.pi)
    fw2 = jnp.concatenate([fw, fw]).reshape(1, two_e)
    phase = jnp.concatenate(
        [jnp.zeros((half_e,), f32),
         jnp.full((half_e,), np.pi / 2.0, f32)]).reshape(1, two_e)

    prep = dict(fw2=fw2, phase=phase,
                w0s=w0s.astype(matmul_dtype), w0e=w0e.astype(matmul_dtype),
                w1=w1.astype(matmul_dtype), w2=w2.astype(matmul_dtype),
                b0=b0, b1=b1, b2=b2,
                x_dim=int(x_dim), cond_dim=int(cond_dim), half_e=int(half_e),
                IN=int(IN), INp=int(INp), H=int(H), O=int(O),
                Hp=int(Hp), Op=int(Op))
    for k in ("fw2", "phase", "w0s", "w0e", "w1", "w2", "b0", "b1", "b2"):
        prep[k] = jax.device_put(prep[k])
    return prep


# --------------------------------- wrapper -----------------------------------

def consistency_score_network(x, cond, sigma, prep, *,
                              cond_mask_prob, training=True, uncond=False,
                              mask_key=None, block_batch=2048):
    """Mirrors ConistencyScoreNetwork.forward (cond_conditional=True)."""
    B = x.shape[0]
    if cond is None:
        raise ValueError("cond_conditional=True forward requires `cond`.")

    # sigma shape handling: () -> (1,1); (B,) -> (B,1); broadcast to batch.
    sigma = jnp.asarray(sigma, jnp.float32)
    if sigma.ndim == 0:
        sigma = sigma.reshape(1, 1)
    elif sigma.ndim == 1:
        sigma = sigma[:, None]
    if sigma.shape[0] != B:
        sigma = jnp.broadcast_to(sigma, (B, 1))

    # mask_cond: per-element Bernoulli, matching the PyTorch implementation.
    if training and cond_mask_prob > 0.0:
        if mask_key is None:
            raise ValueError("mask_key required when training with cond_mask_prob > 0")
        mask = jax.random.bernoulli(mask_key, cond_mask_prob, cond.shape)
        cond = cond * (1.0 - mask.astype(cond.dtype))
    if uncond:
        cond = jnp.zeros_like(cond)

    INp, Op, Hp = prep["INp"], prep["Op"], prep["Hp"]
    IN, two_e = prep["IN"], 2 * prep["half_e"]

    # Batch tiling: TB rows per grid step (multiple of 16 for bf16 sublane
    # packing).  Keep at least 2 grid steps whenever the batch allows so the
    # "parallel" axis can shard across v7x's two TensorCores.
    G = 16
    Bp0 = _round_up(B, G)
    TB = _round_up(min(int(block_batch), Bp0), G)
    if Bp0 // TB < 2 and Bp0 >= 2 * G:
        TB = _round_up((Bp0 + 1) // 2, G)
    Bp = _round_up(B, TB)

    # One lane-dense input slab: [sigma | x | cond | zero-pad] -> (Bp, INp).
    slab = jnp.concatenate(
        [sigma, x.astype(jnp.float32), cond.astype(jnp.float32)], axis=-1)
    slab = jnp.pad(slab, ((0, Bp - B), (0, INp - IN)))

    wbytes = sum(int(np.prod(prep[k].shape)) * prep[k].dtype.itemsize
                 for k in ("w0s", "w0e", "w1", "w2", "b0", "b1", "b2"))
    cost = pl.CostEstimate(
        flops=2 * Bp * (INp * Hp + two_e * Hp + Hp * Hp + Hp * Op),
        transcendentals=Bp * (two_e + 4 * Hp),
        bytes_accessed=4 * Bp * (INp + Op) + wbytes)

    out = pl.pallas_call(
        _csn_kernel,
        out_shape=jax.ShapeDtypeStruct((Bp, Op), jnp.float32),
        grid=(Bp // TB,),
        in_specs=[
            pl.BlockSpec((TB, INp),    lambda i: (i, 0)),   # input slab
            pl.BlockSpec((1, two_e),   lambda i: (0, 0)),   # [W*2pi | W*2pi]
            pl.BlockSpec((1, two_e),   lambda i: (0, 0)),   # phase [0 | pi/2]
            pl.BlockSpec((INp, Hp),    lambda i: (0, 0)),   # W0 (slab part)
            pl.BlockSpec((two_e, Hp),  lambda i: (0, 0)),   # W0 (embed part)
            pl.BlockSpec((1, Hp),      lambda i: (0, 0)),   # b0
            pl.BlockSpec((Hp, Hp),     lambda i: (0, 0)),   # W1
            pl.BlockSpec((1, Hp),      lambda i: (0, 0)),   # b1
            pl.BlockSpec((Hp, Op),     lambda i: (0, 0)),   # W2
            pl.BlockSpec((1, Op),      lambda i: (0, 0)),   # b2
        ],
        out_specs=pl.BlockSpec((TB, Op), lambda i: (i, 0)),
        compiler_params=pltpu.CompilerParams(
            dimension_semantics=("parallel",)),  # v7x: both TCs split batch
        cost_estimate=cost,
    )(slab, prep["fw2"], prep["phase"],
      prep["w0s"], prep["w0e"], prep["b0"], prep["w1"], prep["b1"],
      prep["w2"], prep["b2"])

    # Strip batch/lane padding; return (masked) cond so tests can reuse it.
    return out[:B, :prep["O"]], cond


# ------------------------------ plain-JAX reference --------------------------

def reference_forward(x, cond, sigma, params):
    B = x.shape[0]
    sigma = jnp.asarray(sigma, jnp.float32)
    if sigma.ndim == 0:
        sigma = sigma.reshape(1, 1)
    elif sigma.ndim == 1:
        sigma = sigma[:, None]
    if sigma.shape[0] != B:
        sigma = jnp.broadcast_to(sigma, (B, 1))
    proj = sigma * params["fourier_w"][None, :] * 2.0 * np.pi
    embed = jnp.concatenate([jnp.sin(proj), jnp.cos(proj)], axis=-1)
    h = jnp.concatenate([x, cond, embed], axis=-1)

    def mish(v):
        return v * jnp.tanh(jax.nn.softplus(v))

    h = mish(h @ params["w0"].T + params["b0"])
    h = mish(h @ params["w1"].T + params["b1"])
    return h @ params["w2"].T + params["b2"]


# ----------------------------------- main -------------------------------------

if __name__ == "__main__":
    x_dim = 8
    cond_dim = 8
    time_embed_dim = 16      # -> fourier W has time_embed_dim // 2 = 8 entries
    hidden_dim = 32
    output_dim = 4
    cond_mask_prob = 0.1
    input_dim = time_embed_dim + x_dim + cond_dim   # cond_conditional=True

    key = jax.random.PRNGKey(0)
    keys = jax.random.split(key, 16)

    def linear_init(kw, kb, fan_in, fan_out):
        bound = 1.0 / np.sqrt(fan_in)
        w = jax.random.uniform(kw, (fan_out, fan_in), jnp.float32, -bound, bound)
        b = jax.random.uniform(kb, (fan_out,), jnp.float32, -bound, bound)
        return w, b

    w0, b0 = linear_init(keys[0], keys[1], input_dim, hidden_dim)
    w1, b1 = linear_init(keys[2], keys[3], hidden_dim, hidden_dim)
    w2, b2 = linear_init(keys[4], keys[5], hidden_dim, output_dim)
    params = {
        "fourier_w": jax.random.normal(keys[6], (time_embed_dim // 2,),
                                       jnp.float32) * 30.0,
        "w0": w0, "b0": b0, "w1": w1, "b1": b1, "w2": w2, "b2": b2,
    }

    # One-time parameter prep (hoisted out of the per-call path).
    prep_bf16 = prepare_params(params, x_dim, cond_dim)                  # bf16 MXU
    prep_f32 = prepare_params(params, x_dim, cond_dim,
                              matmul_dtype=jnp.float32)                  # parity

    # --- check 1: small batch, bf16 MXU path, training-time cond masking -----
    B = 16
    x = jax.random.normal(keys[7], (B, x_dim), jnp.float32)
    cond = jax.random.normal(keys[8], (B, cond_dim), jnp.float32)
    sigma = jax.random.uniform(keys[9], (B,), jnp.float32, 0.01, 1.0)

    out, masked_cond = consistency_score_network(
        x, cond, sigma, prep_bf16,
        cond_mask_prob=cond_mask_prob, training=True, uncond=False,
        mask_key=keys[10])
    out = jax.block_until_ready(out)
    ref = reference_forward(x, masked_cond, sigma, params)
    # bf16 matmul operands (~2^-9 rounding) + approx EUP reciprocal in Mish:
    # observed deviation is a few 1e-3; 2e-2 leaves margin while still
    # catching any layout / bias / padding bug (those show up as O(0.1-1)).
    np.testing.assert_allclose(np.asarray(out), np.asarray(ref),
                               rtol=2e-2, atol=2e-2)

    # --- check 2: f32 matmuls; exercises batch padding + 2-step grid ---------
    B2 = 48
    x2 = jax.random.normal(keys[11], (B2, x_dim), jnp.float32)
    cond2 = jax.random.normal(keys[12], (B2, cond_dim), jnp.float32)
    sigma2 = jax.random.uniform(keys[13], (B2,), jnp.float32, 0.01, 1.0)

    out2, cond2_used = consistency_score_network(
        x2, cond2, sigma2, prep_f32,
        cond_mask_prob=0.0, training=False, uncond=False)
    out2 = jax.block_until_ready(out2)
    ref2 = reference_forward(x2, cond2_used, sigma2, params)
    # Only deviation on this path is the approx EUP reciprocal in Mish.
    np.testing.assert_allclose(np.asarray(out2), np.asarray(ref2),
                               rtol=1e-2, atol=1e-2)

    print("KERNEL_OK")
</pallas_src>

<mosaic_0001>
module attributes {stable_mosaic.version = 11 : i64} {
  func.func @_csn_kernel(%arg0: i32, %arg1: memref<16x128xf32, #tpu.memory_space<vmem>>, %arg2: memref<1x16xf32, #tpu.memory_space<vmem>>, %arg3: memref<1x16xf32, #tpu.memory_space<vmem>>, %arg4: memref<128x128xbf16, #tpu.memory_space<vmem>>, %arg5: memref<16x128xbf16, #tpu.memory_space<vmem>>, %arg6: memref<1x128xf32, #tpu.memory_space<vmem>>, %arg7: memref<128x128xbf16, #tpu.memory_space<vmem>>, %arg8: memref<1x128xf32, #tpu.memory_space<vmem>>, %arg9: memref<128x128xbf16, #tpu.memory_space<vmem>>, %arg10: memref<1x128xf32, #tpu.memory_space<vmem>>, %arg11: memref<16x128xf32, #tpu.memory_space<vmem>>) attributes {dimension_semantics = [#tpu.dimension_semantics<parallel>], iteration_bounds = array<i64: 1>, scalar_prefetch = 0 : i64, scratch_operands = 0 : i64, tpu.core_type = #tpu.core_type<tc>, window_params = [{transform_indices = @transform_0, window_bounds = array<i64: 16, 128>}, {pipeline_mode = #tpu.pipeline_mode<synchronous>, transform_indices = @transform_1, window_bounds = array<i64: 1, 16>}, {pipeline_mode = #tpu.pipeline_mode<synchronous>, transform_indices = @transform_2, window_bounds = array<i64: 1, 16>}, {pipeline_mode = #tpu.pipeline_mode<synchronous>, transform_indices = @transform_3, window_bounds = array<i64: 128, 128>}, {pipeline_mode = #tpu.pipeline_mode<synchronous>, transform_indices = @transform_4, window_bounds = array<i64: 16, 128>}, {pipeline_mode = #tpu.pipeline_mode<synchronous>, transform_indices = @transform_5, window_bounds = array<i64: 1, 128>}, {pipeline_mode = #tpu.pipeline_mode<synchronous>, transform_indices = @transform_6, window_bounds = array<i64: 128, 128>}, {pipeline_mode = #tpu.pipeline_mode<synchronous>, transform_indices = @transform_7, window_bounds = array<i64: 1, 128>}, {pipeline_mode = #tpu.pipeline_mode<synchronous>, transform_indices = @transform_8, window_bounds = array<i64: 128, 128>}, {pipeline_mode = #tpu.pipeline_mode<synchronous>, transform_indices = @transform_9, window_bounds = array<i64: 1, 128>}, {transform_indices = @transform_10, window_bounds = array<i64: 16, 128>}]} {
    %c0 = arith.constant 0 : index
    %c0_0 = arith.constant 0 : index
    %0 = vector.load %arg1[%c0, %c0_0] : memref<16x128xf32, #tpu.memory_space<vmem>>, vector<16x128xf32>
    %1 = vector.extract_strided_slice %0 {offsets = [0, 0], sizes = [16, 1], strides = [1, 1]} : vector<16x128xf32> to vector<16x1xf32>
    %c0_1 = arith.constant 0 : index
    %c0_2 = arith.constant 0 : index
    %2 = vector.load %arg2[%c0_1, %c0_2] : memref<1x16xf32, #tpu.memory_space<vmem>>, vector<1x16xf32>
    %3 = vector.broadcast %1 : vector<16x1xf32> to vector<16x16xf32>
    %4 = vector.broadcast %2 : vector<1x16xf32> to vector<16x16xf32>
    %5 = arith.mulf %3, %4 : vector<16x16xf32>
    %c0_3 = arith.constant 0 : index
    %c0_4 = arith.constant 0 : index
    %6 = vector.load %arg3[%c0_3, %c0_4] : memref<1x16xf32, #tpu.memory_space<vmem>>, vector<1x16xf32>
    %7 = vector.broadcast %6 : vector<1x16xf32> to vector<16x16xf32>
    %8 = arith.addf %5, %7 : vector<16x16xf32>
    %9 = math.sin %8 : vector<16x16xf32>
    %10 = arith.truncf %0 : vector<16x128xf32> to vector<16x128xbf16>
    %c0_5 = arith.constant 0 : index
    %c0_6 = arith.constant 0 : index
    %11 = vector.load %arg4[%c0_5, %c0_6] : memref<128x128xbf16, #tpu.memory_space<vmem>>, vector<128x128xbf16>
    %cst = arith.constant dense<0.000000e+00> : vector<16x128xf32>
    %12 = tpu.matmul %10, %11, %cst {dimension_numbers = #tpu.dot_dimension_numbers<[1], [0], [0], [1], [0, 0, 1, 1], [], []>} : vector<16x128xbf16>, vector<128x128xbf16>, vector<16x128xf32> -> vector<16x128xf32>
    %13 = arith.truncf %9 : vector<16x16xf32> to vector<16x16xbf16>
    %c0_7 = arith.constant 0 : index
    %c0_8 = arith.constant 0 : index
    %14 = vector.load %arg5[%c0_7, %c0_8] : memref<16x128xbf16, #tpu.memory_space<vmem>>, vector<16x128xbf16>
    %cst_9 = arith.constant dense<0.000000e+00> : vector<16x128xf32>
    %15 = tpu.matmul %13, %14, %cst_9 {dimension_numbers = #tpu.dot_dimension_numbers<[1], [0], [0], [1], [0, 0, 1, 1], [], []>} : vector<16x16xbf16>, vector<16x128xbf16>, vector<16x128xf32> -> vector<16x128xf32>
    %16 = arith.addf %12, %15 : vector<16x128xf32>
    %c0_10 = arith.constant 0 : index
    %c0_11 = arith.constant 0 : index
    %17 = vector.load %arg6[%c0_10, %c0_11] : memref<1x128xf32, #tpu.memory_space<vmem>>, vector<1x128xf32>
    %18 = vector.broadcast %17 : vector<1x128xf32> to vector<16x128xf32>
    %19 = arith.addf %16, %18 : vector<16x128xf32>
    %cst_12 = arith.constant 2.000000e+01 : f32
    %20 = vector.broadcast %cst_12 : f32 to vector<16x128xf32>
    %21 = arith.minimumf %19, %20 : vector<16x128xf32>
    %22 = math.exp %21 : vector<16x128xf32>
    %cst_13 = arith.constant 2.000000e+00 : f32
    %23 = vector.broadcast %cst_13 : f32 to vector<16x128xf32>
    %24 = arith.addf %22, %23 : vector<16x128xf32>
    %25 = arith.mulf %22, %24 : vector<16x128xf32>
    %26 = arith.mulf %19, %25 : vector<16x128xf32>
    %cst_14 = arith.constant 2.000000e+00 : f32
    %27 = vector.broadcast %cst_14 : f32 to vector<16x128xf32>
    %28 = arith.addf %25, %27 : vector<16x128xf32>
    %29 = tpu.reciprocal %28 {approx = true} : vector<16x128xf32> -> vector<16x128xf32>
    %30 = arith.mulf %26, %29 : vector<16x128xf32>
    %31 = arith.truncf %30 : vector<16x128xf32> to vector<16x128xbf16>
    %c0_15 = arith.constant 0 : index
    %c0_16 = arith.constant 0 : index
    %32 = vector.load %arg7[%c0_15, %c0_16] : memref<128x128xbf16, #tpu.memory_space<vmem>>, vector<128x128xbf16>
    %cst_17 = arith.constant dense<0.000000e+00> : vector<16x128xf32>
    %33 = tpu.matmul %31, %32, %cst_17 {dimension_numbers = #tpu.dot_dimension_numbers<[1], [0], [0], [1], [0, 0, 1, 1], [], []>} : vector<16x128xbf16>, vector<128x128xbf16>, vector<16x128xf32> -> vector<16x128xf32>
    %c0_18 = arith.constant 0 : index
    %c0_19 = arith.constant 0 : index
    %34 = vector.load %arg8[%c0_18, %c0_19] : memref<1x128xf32, #tpu.memory_space<vmem>>, vector<1x128xf32>
    %35 = vector.broadcast %34 : vector<1x128xf32> to vector<16x128xf32>
    %36 = arith.addf %33, %35 : vector<16x128xf32>
    %cst_20 = arith.constant 2.000000e+01 : f32
    %37 = vector.broadcast %cst_20 : f32 to vector<16x128xf32>
    %38 = arith.minimumf %36, %37 : vector<16x128xf32>
    %39 = math.exp %38 : vector<16x128xf32>
    %cst_21 = arith.constant 2.000000e+00 : f32
    %40 = vector.broadcast %cst_21 : f32 to vector<16x128xf32>
    %41 = arith.addf %39, %40 : vector<16x128xf32>
    %42 = arith.mulf %39, %41 : vector<16x128xf32>
    %43 = arith.mulf %36, %42 : vector<16x128xf32>
    %cst_22 = arith.constant 2.000000e+00 : f32
    %44 = vector.broadcast %cst_22 : f32 to vector<16x128xf32>
    %45 = arith.addf %42, %44 : vector<16x128xf32>
    %46 = tpu.reciprocal %45 {approx = true} : vector<16x128xf32> -> vector<16x128xf32>
    %47 = arith.mulf %43, %46 : vector<16x128xf32>
    %48 = arith.truncf %47 : vector<16x128xf32> to vector<16x128xbf16>
    %c0_23 = arith.constant 0 : index
    %c0_24 = arith.constant 0 : index
    %49 = vector.load %arg9[%c0_23, %c0_24] : memref<128x128xbf16, #tpu.memory_space<vmem>>, vector<128x128xbf16>
    %cst_25 = arith.constant dense<0.000000e+00> : vector<16x128xf32>
    %50 = tpu.matmul %48, %49, %cst_25 {dimension_numbers = #tpu.dot_dimension_numbers<[1], [0], [0], [1], [0, 0, 1, 1], [], []>} : vector<16x128xbf16>, vector<128x128xbf16>, vector<16x128xf32> -> vector<16x128xf32>
    %c0_26 = arith.constant 0 : index
    %c0_27 = arith.constant 0 : index
    %51 = vector.load %arg10[%c0_26, %c0_27] : memref<1x128xf32, #tpu.memory_space<vmem>>, vector<1x128xf32>
    %52 = vector.broadcast %51 : vector<1x128xf32> to vector<16x128xf32>
    %53 = arith.addf %50, %52 : vector<16x128xf32>
    %c0_28 = arith.constant 0 : index
    %c0_29 = arith.constant 0 : index
    %54 = vector.load %arg11[%c0_28, %c0_29] : memref<16x128xf32, #tpu.memory_space<vmem>>, vector<16x128xf32>
    tpu.vector_store %arg11[%c0_28, %c0_29], %53 {strides = array<i32>} : memref<16x128xf32, #tpu.memory_space<vmem>>, vector<16x128xf32>,
    return
  }
  func.func @transform_0(%arg0: i32) -> (i32, i32) {
    %c0_i32 = arith.constant 0 : i32
    %c0_i32_0 = arith.constant 0 : i32
    return %arg0, %c0_i32 : i32, i32
  }
  func.func @transform_1(%arg0: i32) -> (i32, i32) {
    %c0_i32 = arith.constant 0 : i32
    %c0_i32_0 = arith.constant 0 : i32
    %c0_i32_1 = arith.constant 0 : i32
    return %c0_i32, %c0_i32_0 : i32, i32
  }
  func.func @transform_2(%arg0: i32) -> (i32, i32) {
    %c0_i32 = arith.constant 0 : i32
    %c0_i32_0 = arith.constant 0 : i32
    %c0_i32_1 = arith.constant 0 : i32
    return %c0_i32, %c0_i32_0 : i32, i32
  }
  func.func @transform_3(%arg0: i32) -> (i32, i32) {
    %c0_i32 = arith.constant 0 : i32
    %c0_i32_0 = arith.constant 0 : i32
    %c0_i32_1 = arith.constant 0 : i32
    return %c0_i32, %c0_i32_0 : i32, i32
  }
  func.func @transform_4(%arg0: i32) -> (i32, i32) {
    %c0_i32 = arith.constant 0 : i32
    %c0_i32_0 = arith.constant 0 : i32
    %c0_i32_1 = arith.constant 0 : i32
    return %c0_i32, %c0_i32_0 : i32, i32
  }
  func.func @transform_5(%arg0: i32) -> (i32, i32) {
    %c0_i32 = arith.constant 0 : i32
    %c0_i32_0 = arith.constant 0 : i32
    %c0_i32_1 = arith.constant 0 : i32
    return %c0_i32, %c0_i32_0 : i32, i32
  }
  func.func @transform_6(%arg0: i32) -> (i32, i32) {
    %c0_i32 = arith.constant 0 : i32
    %c0_i32_0 = arith.constant 0 : i32
    %c0_i32_1 = arith.constant 0 : i32
    return %c0_i32, %c0_i32_0 : i32, i32
  }
  func.func @transform_7(%arg0: i32) -> (i32, i32) {
    %c0_i32 = arith.constant 0 : i32
    %c0_i32_0 = arith.constant 0 : i32
    %c0_i32_1 = arith.constant 0 : i32
    return %c0_i32, %c0_i32_0 : i32, i32
  }
  func.func @transform_8(%arg0: i32) -> (i32, i32) {
    %c0_i32 = arith.constant 0 : i32
    %c0_i32_0 = arith.constant 0 : i32
    %c0_i32_1 = arith.constant 0 : i32
    return %c0_i32, %c0_i32_0 : i32, i32
  }
  func.func @transform_9(%arg0: i32) -> (i32, i32) {
    %c0_i32 = arith.constant 0 : i32
    %c0_i32_0 = arith.constant 0 : i32
    %c0_i32_1 = arith.constant 0 : i32
    return %c0_i32, %c0_i32_0 : i32, i32
  }
  func.func @transform_10(%arg0: i32) -> (i32, i32) {
    %c0_i32 = arith.constant 0 : i32
    %c0_i32_0 = arith.constant 0 : i32
    return %arg0, %c0_i32 : i32, i32
  }
}

</mosaic_0001>

<llo_original>
// kernel: tpu_custom_call.1
$region0: #{tpu_custom_call.1}
  #allocation0 [shape = 'u32[]', space=smem, size = 0x4, offset = 0x4, fixed_abs, tag = 'smem constant byte address 0x4 - core index']
  #allocation1 [shape = 'u32[144,128]{1,0:T(1,128)}', space=vmem, size = 0x12000, scoped, tag = 'internal scratch']
  %s0 = inlined_call_operand.hbm [shape: f32[16,128], index: 0, kind: input, shape index: {}]
  %s1 = inlined_call_operand.vmem [shape: f32[1,16], index: 1, kind: input, shape index: {}]
  %s2 = inlined_call_operand.vmem [shape: f32[1,16], index: 2, kind: input, shape index: {}]
  %s3 = inlined_call_operand.hbm [shape: bf16[128,128], index: 3, kind: input, shape index: {}]
  %s4 = inlined_call_operand.hbm [shape: bf16[16,128], index: 4, kind: input, shape index: {}]
  %s5 = inlined_call_operand.vmem [shape: f32[1,128], index: 5, kind: input, shape index: {}]
  %s6 = inlined_call_operand.hbm [shape: bf16[128,128], index: 6, kind: input, shape index: {}]
  %s7 = inlined_call_operand.vmem [shape: f32[1,128], index: 7, kind: input, shape index: {}]
  %s8 = inlined_call_operand.hbm [shape: bf16[128,128], index: 8, kind: input, shape index: {}]
  %s9 = inlined_call_operand.vmem [shape: f32[1,128], index: 9, kind: input, shape index: {}]
  %s10 = inlined_call_operand.hbm [shape: f32[16,128], index: 10, kind: output, shape index: {}]
  %s11 = sld [smem:[#allocation0]]
  $region70: #{tpu_custom_call.1} parent=0
    _
  %s13 = ssub.s32 1, %s11
  %s14 = scalar_select 0, %s13, %s11
  $region1: #{tpu_custom_call.1} parent=0
    #allocation2 [shape = 'u8[8192]{0}', space=vmem, size = 0x2000, scoped, tag = 'input window, operand 0, single buffered']
    #allocation3 [shape = 's32[1]{0}', space=sflag, size = 0x4, scoped, tag = 'scoped memory for tpu_custom_call.1']
    #allocation4 [shape = 's32[1]{0}', space=sflag, size = 0x4, scoped, tag = 'scoped memory for tpu_custom_call.1']
    #allocation5 [shape = 'u8[32768]{0}', space=vmem, size = 0x8000, scoped, tag = 'input window, operand 3, single buffered']
    #allocation6 [shape = 's32[1]{0}', space=sflag, size = 0x4, scoped, tag = 'scoped memory for tpu_custom_call.1']
    #allocation7 [shape = 'u8[4096]{0}', space=vmem, size = 0x1000, scoped, tag = 'input window, operand 4, single buffered']
    #allocation8 [shape = 'u8[32768]{0}', space=vmem, size = 0x8000, scoped, tag = 'input window, operand 6, single buffered']
    #allocation9 [shape = 's32[1]{0}', space=sflag, size = 0x4, scoped, tag = 'scoped memory for tpu_custom_call.1']
    #allocation10 [shape = 'u8[32768]{0}', space=vmem, size = 0x8000, scoped, tag = 'input window, operand 8, single buffered']
    #allocation11 [shape = 'u8[8192]{0}', space=vmem, size = 0x2000, scoped, tag = 'output window, operand 0, single buffered']
    %15 = vsyncpa [#allocation3], 0
    %16 = vsyncpa [#allocation6], 0
    %17 = vsyncpa [#allocation9], 0
    %18 = vsyncpa [#allocation4], 0
    // Predicated region
    $region2: #{tpu_custom_call.1} parent=1 // pred_check
      _
    $region3: #{tpu_custom_call.1} parent=1 // pred_check_branch
      %20 = sbr.rel (0) target = $region5
    $region4: #{tpu_custom_call.1} parent=1 // pred_region
      %s22 = ssub.s32 256, 256
      %23 = vsyncadd [#allocation3], %s22
      %s24 = sshll.u32 [#allocation2], 4
      %s25 = int_to_ptr.vmem [resolvable:$true] %s24
      %30 = dma.hbm_to_vmem [thread:$0]  %s0, 256, %s25, [#allocation3], 128, 128, 8
    $region5: #{tpu_custom_call.1} parent=1 // pred_fallthru
      _
    // Predicated region
    $region6: #{tpu_custom_call.1} parent=1 // pred_check
      _
    $region7: #{tpu_custom_call.1} parent=1 // pred_check_branch
      %32 = sbr.rel (0) target = $region9
    $region8: #{tpu_custom_call.1} parent=1 // pred_region
      _
    $region9: #{tpu_custom_call.1} parent=1 // pred_fallthru
      _
    // Predicated region
    $region10: #{tpu_custom_call.1} parent=1 // pred_check
      _
    $region11: #{tpu_custom_call.1} parent=1 // pred_check_branch
      %34 = sbr.rel (0) target = $region13
    $region12: #{tpu_custom_call.1} parent=1 // pred_region
      _
    $region13: #{tpu_custom_call.1} parent=1 // pred_fallthru
      _
    // Predicated region
    $region14: #{tpu_custom_call.1} parent=1 // pred_check
      _
    $region15: #{tpu_custom_call.1} parent=1 // pred_check_branch
      %36 = sbr.rel (0) target = $region17
    $region16: #{tpu_custom_call.1} parent=1 // pred_region
      %s38 = ssub.s32 1024, 1024
      %39 = vsyncadd [#allocation6], %s38
      %s40 = sshll.u32 [#allocation5], 4
      %s41 = int_to_ptr.vmem [resolvable:$true] %s40
      %46 = dma.hbm_to_vmem [thread:$0]  %s3, 1024, %s41, [#allocation6], 64, 64, 4
    $region17: #{tpu_custom_call.1} parent=1 // pred_fallthru
      _
    // Predicated region
    $region18: #{tpu_custom_call.1} parent=1 // pred_check
      _
    $region19: #{tpu_custom_call.1} parent=1 // pred_check_branch
      %48 = sbr.rel (0) target = $region21
    $region20: #{tpu_custom_call.1} parent=1 // pred_region
      %s50 = ssub.s32 128, 128
      %51 = vsyncadd [#allocation6], %s50
      %s52 = sshll.u32 [#allocation7], 4
      %s53 = int_to_ptr.vmem [resolvable:$true] %s52
      %58 = dma.hbm_to_vmem [thread:$0]  %s4, 128, %s53, [#allocation6], 64, 64, 4
    $region21: #{tpu_custom_call.1} parent=1 // pred_fallthru
      _
    // Predicated region
    $region22: #{tpu_custom_call.1} parent=1 // pred_check
      _
    $region23: #{tpu_custom_call.1} parent=1 // pred_check_branch
      %60 = sbr.rel (0) target = $region25
    $region24: #{tpu_custom_call.1} parent=1 // pred_region
      _
    $region25: #{tpu_custom_call.1} parent=1 // pred_fallthru
      _
    // Predicated region
    $region26: #{tpu_custom_call.1} parent=1 // pred_check
      _
    $region27: #{tpu_custom_call.1} parent=1 // pred_check_branch
      %62 = sbr.rel (0) target = $region29
    $region28: #{tpu_custom_call.1} parent=1 // pred_region
      %s64 = ssub.s32 1024, 1024
      %65 = vsyncadd [#allocation9], %s64
      %s66 = sshll.u32 [#allocation8], 4
      %s67 = int_to_ptr.vmem [resolvable:$true] %s66
      %72 = dma.hbm_to_vmem [thread:$0]  %s6, 1024, %s67, [#allocation9], 64, 64, 4
    $region29: #{tpu_custom_call.1} parent=1 // pred_fallthru
      _
    // Predicated region
    $region30: #{tpu_custom_call.1} parent=1 // pred_check
      _
    $region31: #{tpu_custom_call.1} parent=1 // pred_check_branch
      %74 = sbr.rel (0) target = $region33
    $region32: #{tpu_custom_call.1} parent=1 // pred_region
      _
    $region33: #{tpu_custom_call.1} parent=1 // pred_fallthru
      _
    // Predicated region
    $region34: #{tpu_custom_call.1} parent=1 // pred_check
      _
    $region35: #{tpu_custom_call.1} parent=1 // pred_check_branch
      %76 = sbr.rel (0) target = $region37
    $region36: #{tpu_custom_call.1} parent=1 // pred_region
      %s78 = ssub.s32 1024, 1024
      %79 = vsyncadd [#allocation9], %s78
      %s80 = sshll.u32 [#allocation10], 4
      %s81 = int_to_ptr.vmem [resolvable:$true] %s80
      %86 = dma.hbm_to_vmem [thread:$0]  %s8, 1024, %s81, [#allocation9], 64, 64, 4
    $region37: #{tpu_custom_call.1} parent=1 // pred_fallthru
      _
    // Predicated region
    $region38: #{tpu_custom_call.1} parent=1 // pred_check
      _
    $region39: #{tpu_custom_call.1} parent=1 // pred_check_branch
      %88 = sbr.rel (0) target = $region41
    $region40: #{tpu_custom_call.1} parent=1 // pred_region
      _
    $region41: #{tpu_custom_call.1} parent=1 // pred_fallthru
      _
    // Predicated region
    $region42: #{tpu_custom_call.1} parent=1 // pred_check
      _
    $region43: #{tpu_custom_call.1} parent=1 // pred_check_branch
      %90 = sbr.rel (0) target = $region45
    $region44: #{tpu_custom_call.1} parent=1 // pred_region
      %91 = dma.done [#allocation3], 256
    $region45: #{tpu_custom_call.1} parent=1 // pred_fallthru
      _
    // Predicated region
    $region46: #{tpu_custom_call.1} parent=1 // pred_check
      _
    $region47: #{tpu_custom_call.1} parent=1 // pred_check_branch
      %93 = sbr.rel (0) target = $region49
    $region48: #{tpu_custom_call.1} parent=1 // pred_region
      %94 = dma.done [#allocation6], 1024
    $region49: #{tpu_custom_call.1} parent=1 // pred_fallthru
      _
    // Predicated region
    $region50: #{tpu_custom_call.1} parent=1 // pred_check
      _
    $region51: #{tpu_custom_call.1} parent=1 // pred_check_branch
      %96 = sbr.rel (0) target = $region53
    $region52: #{tpu_custom_call.1} parent=1 // pred_region
      %97 = dma.done [#allocation6], 128
    $region53: #{tpu_custom_call.1} parent=1 // pred_fallthru
      _
    // Predicated region
    $region54: #{tpu_custom_call.1} parent=1 // pred_check
      _
    $region55: #{tpu_custom_call.1} parent=1 // pred_check_branch
      %99 = sbr.rel (0) target = $region57
    $region56: #{tpu_custom_call.1} parent=1 // pred_region
      %100 = dma.done [#allocation9], 1024
    $region57: #{tpu_custom_call.1} parent=1 // pred_fallthru
      _
    // Predicated region
    $region58: #{tpu_custom_call.1} parent=1 // pred_check
      _
    $region59: #{tpu_custom_call.1} parent=1 // pred_check_branch
      %102 = sbr.rel (0) target = $region61
    $region60: #{tpu_custom_call.1} parent=1 // pred_region
      %103 = dma.done [#allocation9], 1024
    $region61: #{tpu_custom_call.1} parent=1 // pred_fallthru
      _
    %v105 = vld [vmem:[#allocation2] sm:$0xff]
    %v106 = vld [vmem:[#allocation2 + $0x8] sm:$0xff]
    %v107 = vld [vmem:[%s1] sm:$0x1]
    %109 = vset.pattern.permute.xlu0 0
    %110 = vperm.xlu0 %109, %v105
    %v111 = vpop.permute.xlu0 %110
    %114 = vset.pattern.permute.xlu0 0
    %115 = vperm.xlu0 %114, %v106
    %v116 = vpop.permute.xlu0 %115
    %v119 = vlaneseq
    %v120 = vshrl.u32 %v119, 7
    %v121 = vsub.s32 0, %v120
    %v122 = vrot.slane %v107, %v121
    %v124 = vmul.f32 %v111, %v122
    %v125 = vmul.f32 %v116, %v122
    %v126 = vld [vmem:[%s2] sm:$0x1]
    %v128 = vlaneseq
    %v129 = vshrl.u32 %v128, 7
    %v130 = vsub.s32 0, %v129
    %v131 = vrot.slane %v126, %v130
    %v133 = vadd.f32 %v124, %v131
    %v134 = vadd.f32 %v125, %v131
    %v135 = vand.u32 2147483647, %v133
    %vm136 = vcmp.le.f32.partialorder %v135, 0.7853982
    %vm137 = vcmp.lt.s32.totalorder %v133, 0
    %v138 = vand.u32 %v133, 2139095040
    %v139 = vshrl.u32 %v138, 23
    %v140 = vsub.s32 %v139, 127
    %v141 = vand.u32 2147483647, %v133
    %v142 = vand.u32 %v141, 8388607
    %v143 = vor.u32 %v142, 8388608
    %v144 = vsub.s32 0, %v143
    %v145 = vadd.s32 %v140, 1
    %vm146 = vcmp.gt.s32.totalorder %v145, 0
    %v147 = vsel %vm146, %v145, 0
    %v148 = vshrl.u32 %v147, 5
    %v149 = vand.u32 %v147, 31
    %v150 = vsub.s32 32, %v149
    %v151 = vshrl.u32 683565275, %v150
    %v152 = vshll.u32 683565275, %v149
    %v153 = vshrl.u32 2475754826, %v150
    %v154 = vor.u32 %v152, %v153
    %v155 = vshll.u32 2475754826, %v149
    %v156 = vshrl.u32 2131351028, %v150
    %v157 = vor.u32 %v155, %v156
    %v158 = vshll.u32 2131351028, %v149
    %v159 = vshrl.u32 2102212464, %v150
    %v160 = vor.u32 %v158, %v159
    %v161 = vshll.u32 2102212464, %v149
    %v162 = vshrl.u32 920167782, %v150
    %v163 = vor.u32 %v161, %v162
    %v164 = vshll.u32 920167782, %v149
    %v165 = vshrl.u32 1326507024, %v150
    %v166 = vor.u32 %v164, %v165
    %vm167 = vcmp.lt.s32.totalorder %v148, 1
    %vm168 = vcmp.lt.s32.totalorder %v148, 2
    %vm169 = vcmp.lt.s32.totalorder %v148, 3
    %vm170 = vcmp.lt.s32.totalorder %v148, 4
    %v171 = vsel %vm167, %v151, %v154
    %v172 = vsel %vm170, %v160, 2102212464
    %v173 = vsel %vm169, %v157, %v172
    %v174 = vsel %vm168, %v171, %v173
    %v175 = vsel %vm167, %v154, %v157
    %v176 = vsel %vm170, %v163, 920167782
    %v177 = vsel %vm169, %v160, %v176
    %v178 = vsel %vm168, %v175, %v177
    %v179 = vsel %vm167, %v157, %v160
    %v180 = vsel %vm170, %v166, 1326507024
    %v181 = vsel %vm169, %v163, %v180
    %v182 = vsel %vm168, %v179, %v181
    %v183 = vshll.u32 %v143, 8
    %v184 = vmul.u32.u64.compose %v183, %v182
    %v185 = vextract.low.u32 %v184
    %v186 = vextract.high.u32 %v184
    %v187 = vmul.u32.u64.compose %v183, %v178
    %v188 = vextract.low.u32 %v187
    %v189 = vextract.high.u32 %v187
    %v190 = vmul.u32 %v183, %v174
    %v191 = vadd.s32 %v186, %v188
    %vm192 = vc.u32 %v186, %v188
    %v193 = vadd.s32 %v189, 1
    %v194 = vsel %vm192, %v193, %v189
    %v195 = vadd.s32 %v190, %v194
    %v196 = vadd.s32 %v195, 536870912
    %v197 = vshrl.u32 %v196, 30
    %v198 = vshll.u32 %v197, 30
    %v199 = vsub.s32 %v195, %v198
    %vm200 = vcmp.lt.s32.totalorder %v199, 0
    %v201 = vsub.s32 0, %v199
    %v202 = vsel %vm200, %v201, %v199
    %v203 = vclz %v202
    %v204 = vsub.s32 %v203, 2
    %vm205 = vcmp.gt.s32.totalorder 0, %v204
    %v206 = vsel %vm205, 0, %v204
    %v207 = vsub.s32 32, %v206
    %v208 = vshll.u32 %v199, %v206
    %v209 = vshrl.u32 %v191, %v207
    %v210 = vor.u32 %v208, %v209
    %v211 = vsub.s32 4294967266, %v206
    %v212 = vadd.s32 %v211, 127
    %v213 = vshll.u32 %v212, 23
    %v214 = vor.u32 4788187, %v213
    %v215 = vand.u32 2147483647, %v214
    %v217 = vcvt.s32.f32 %v210
    %v218 = vmul.f32 %v217, %v215
    %v219 = vxor.u32 %v218, 2147483648
    %v220 = vsel %vm137, %v219, %v218
    %v221 = vsub.s32 4, %v197
    %v222 = vsel %vm137, %v221, %v197
    %v223 = vsel %vm136, %v133, %v220
    %v224 = vsel %vm136, 0, %v222
    %v225 = vcosq.f32.pop %v223
    %v226 = vsinq.f32.pop %v223
    %vm227 = vweird.f32 %v133
    %v228 = vadd.s32 %v224, 3
    %v229 = vand.u32 %v228, 3
    %vm230 = vcmp.lt.s32.totalorder %v229, 2
    %vm231 = vcmp.eq.s32.totalorder %v229, 0
    %v232 = vxor.u32 %v226, 2147483648
    %v233 = vsel %vm231, %v225, %v232
    %vm234 = vcmp.eq.s32.totalorder %v229, 2
    %v235 = vxor.u32 %v225, 2147483648
    %v236 = vsel %vm234, %v235, %v226
    %v237 = vsel %vm230, %v233, %v236
    %v238 = vsel %vm227, nan, %v237
    %v239 = vand.u32 2147483647, %v134
    %vm240 = vcmp.le.f32.partialorder %v239, 0.7853982
    %vm241 = vcmp.lt.s32.totalorder %v134, 0
    %v242 = vand.u32 %v134, 2139095040
    %v243 = vshrl.u32 %v242, 23
    %v244 = vsub.s32 %v243, 127
    %v245 = vand.u32 2147483647, %v134
    %v246 = vand.u32 %v245, 8388607
    %v247 = vor.u32 %v246, 8388608
    %v248 = vsub.s32 0, %v247
    %v249 = vadd.s32 %v244, 1
    %vm250 = vcmp.gt.s32.totalorder %v249, 0
    %v251 = vsel %vm250, %v249, 0
    %v252 = vshrl.u32 %v251, 5
    %v253 = vand.u32 %v251, 31
    %v254 = vsub.s32 32, %v253
    %v255 = vshrl.u32 683565275, %v254
    %v256 = vshll.u32 683565275, %v253
    %v257 = vshrl.u32 2475754826, %v254
    %v258 = vor.u32 %v256, %v257
    %v259 = vshll.u32 2475754826, %v253
    %v260 = vshrl.u32 2131351028, %v254
    %v261 = vor.u32 %v259, %v260
    %v262 = vshll.u32 2131351028, %v253
    %v263 = vshrl.u32 2102212464, %v254
    %v264 = vor.u32 %v262, %v263
    %v265 = vshll.u32 2102212464, %v253
    %v266 = vshrl.u32 920167782, %v254
    %v267 = vor.u32 %v265, %v266
    %v268 = vshll.u32 920167782, %v253
    %v269 = vshrl.u32 1326507024, %v254
    %v270 = vor.u32 %v268, %v269
    %vm271 = vcmp.lt.s32.totalorder %v252, 1
    %vm272 = vcmp.lt.s32.totalorder %v252, 2
    %vm273 = vcmp.lt.s32.totalorder %v252, 3
    %vm274 = vcmp.lt.s32.totalorder %v252, 4
    %v275 = vsel %vm271, %v255, %v258
    %v276 = vsel %vm274, %v264, 2102212464
    %v277 = vsel %vm273, %v261, %v276
    %v278 = vsel %vm272, %v275, %v277
    %v279 = vsel %vm271, %v258, %v261
    %v280 = vsel %vm274, %v267, 920167782
    %v281 = vsel %vm273, %v264, %v280
    %v282 = vsel %vm272, %v279, %v281
    %v283 = vsel %vm271, %v261, %v264
    %v284 = vsel %vm274, %v270, 1326507024
    %v285 = vsel %vm273, %v267, %v284
    %v286 = vsel %vm272, %v283, %v285
    %v287 = vshll.u32 %v247, 8
    %v288 = vmul.u32.u64.compose %v287, %v286
    %v289 = vextract.low.u32 %v288
    %v290 = vextract.high.u32 %v288
    %v291 = vmul.u32.u64.compose %v287, %v282
    %v292 = vextract.low.u32 %v291
    %v293 = vextract.high.u32 %v291
    %v294 = vmul.u32 %v287, %v278
    %v295 = vadd.s32 %v290, %v292
    %vm296 = vc.u32 %v290, %v292
    %v297 = vadd.s32 %v293, 1
    %v298 = vsel %vm296, %v297, %v293
    %v299 = vadd.s32 %v294, %v298
    %v300 = vadd.s32 %v299, 536870912
    %v301 = vshrl.u32 %v300, 30
    %v302 = vshll.u32 %v301, 30
    %v303 = vsub.s32 %v299, %v302
    %vm304 = vcmp.lt.s32.totalorder %v303, 0
    %v305 = vsub.s32 0, %v303
    %v306 = vsel %vm304, %v305, %v303
    %v307 = vclz %v306
    %v308 = vsub.s32 %v307, 2
    %vm309 = vcmp.gt.s32.totalorder 0, %v308
    %v310 = vsel %vm309, 0, %v308
    %v311 = vsub.s32 32, %v310
    %v312 = vshll.u32 %v303, %v310
    %v313 = vshrl.u32 %v295, %v311
    %v314 = vor.u32 %v312, %v313
    %v315 = vsub.s32 4294967266, %v310
    %v316 = vadd.s32 %v315, 127
    %v317 = vshll.u32 %v316, 23
    %v318 = vor.u32 4788187, %v317
    %v319 = vand.u32 2147483647, %v318
    %v321 = vcvt.s32.f32 %v314
    %v322 = vmul.f32 %v321, %v319
    %v323 = vxor.u32 %v322, 2147483648
    %v324 = vsel %vm241, %v323, %v322
    %v325 = vsub.s32 4, %v301
    %v326 = vsel %vm241, %v325, %v301
    %v327 = vsel %vm240, %v134, %v324
    %v328 = vsel %vm240, 0, %v326
    %v329 = vcosq.f32.pop %v327
    %v330 = vsinq.f32.pop %v327
    %vm331 = vweird.f32 %v134
    %v332 = vadd.s32 %v328, 3
    %v333 = vand.u32 %v332, 3
    %vm334 = vcmp.lt.s32.totalorder %v333, 2
    %vm335 = vcmp.eq.s32.totalorder %v333, 0
    %v336 = vxor.u32 %v330, 2147483648
    %v337 = vsel %vm335, %v329, %v336
    %vm338 = vcmp.eq.s32.totalorder %v333, 2
    %v339 = vxor.u32 %v329, 2147483648
    %v340 = vsel %vm338, %v339, %v330
    %v341 = vsel %vm334, %v337, %v340
    %v342 = vsel %vm331, nan, %v341
    %v343 = vpack.c.bf16 %v106, %v105
    %v344 = vld [vmem:[#allocation5] sm:$0xf]
    %v345 = vld [vmem:[#allocation5 + $0x4] sm:$0xf]
    %v346 = vld [vmem:[#allocation5 + $0x8] sm:$0xf]
    %v347 = vld [vmem:[#allocation5 + $0xc] sm:$0xf]
    %v348 = vld [vmem:[#allocation5 + $0x10] sm:$0xf]
    %v349 = vld [vmem:[#allocation5 + $0x14] sm:$0xf]
    %v350 = vld [vmem:[#allocation5 + $0x18] sm:$0xf]
    %v351 = vld [vmem:[#allocation5 + $0x1c] sm:$0xf]
    %v352 = vld [vmem:[#allocation5 + $0x20] sm:$0xf]
    %v353 = vld [vmem:[#allocation5 + $0x24] sm:$0xf]
    %v354 = vld [vmem:[#allocation5 + $0x28] sm:$0xf]
    %v355 = vld [vmem:[#allocation5 + $0x2c] sm:$0xf]
    %v356 = vld [vmem:[#allocation5 + $0x30] sm:$0xf]
    %v357 = vld [vmem:[#allocation5 + $0x34] sm:$0xf]
    %v358 = vld [vmem:[#allocation5 + $0x38] sm:$0xf]
    %v359 = vld [vmem:[#allocation5 + $0x3c] sm:$0xf]
    %v360 = vpack.c.bf16 %v342, %v238
    %v361 = vld [vmem:[#allocation7] sm:$0xf]
    %v362 = vld [vmem:[#allocation7 + $0x4] sm:$0xf]
    %v365 = vunpack.c.l.b16 %v361
    %v366 = vunpack.c.l.b16 %v362
    %v367 = vpack.c.b16 %v366, %v365
    %vm369 = vcmask 130048
    %v371 = vsel %vm369, %v360, 0
    %373 = vmatprep.subr.bf16.mxu0 0
    %374 = vmatpush1.bf16.msra.mxu0 0
    %375 = vmatprep.subr.bf16.mxu0 0
    %376 = vmatpush1.bf16.msra.mxu0 0
    %377 = vmatprep.subr.bf16.mxu0 0
    %378 = vmatpush1.bf16.msra.mxu0 0
    %379 = vmatprep.subr.bf16.mxu0 0
    %380 = vmatpush1.bf16.msra.mxu0 0
    %381 = vmatprep.subr.bf16.mxu0 0
    %382 = vmatpush1.bf16.msra.mxu0 0
    %383 = vmatprep.subr.bf16.mxu0 0
    %384 = vmatpush1.bf16.msra.mxu0 0
    %385 = vmatprep.subr.bf16.mxu0 0
    %386 = vmatpush1.bf16.msra.mxu0 0
    %387 = vmatprep.subr.bf16.mxu0 0
    %388 = vmatpush1.bf16.msra.mxu0 %v367
    %389 = vmatprep.subr.bf16.mxu0 0
    %390 = vmatpush2.bf16.msra.mxu0 0
    %391 = vmatprep.subr.bf16.mxu0 0
    %392 = vmatpush2.bf16.msra.mxu0 0
    %393 = vmatprep.subr.bf16.mxu0 0
    %394 = vmatpush2.bf16.msra.mxu0 0
    %395 = vmatprep.subr.bf16.mxu0 0
    %396 = vmatpush2.bf16.msra.mxu0 0
    %397 = vmatprep.subr.bf16.mxu0 0
    %398 = vmatpush2.bf16.msra.mxu0 0
    %399 = vmatprep.subr.bf16.mxu0 0
    %400 = vmatpush2.bf16.msra.mxu0 0
    %401 = vmatprep.subr.bf16.mxu0 0
    %402 = vmatpush2.bf16.msra.mxu0 0
    %403 = vmatprep.subr.bf16.mxu0 0
    %404 = vmatpush2.bf16.msra.mxu0 0
    %405 = vmatprep.mubr.bf16.mxu0 0
    %406 = vmatmul.mubr.bf16.gmra.mxu0 %v371
    %v407 = vpop.f32.mrf.mxu0
    %v408 = vadd.f32 0.0, %v407
    %v409 = vpop.f32.mrf.mxu0
    %v410 = vpop.f32.mrf.mxu0
    %v411 = vadd.f32 0.0, %v410
    %v412 = vpop.f32.mrf.mxu0
    %413 = vdwg.mxu0
    %v430 = vunpack.c.l.b16 %v344
    %v431 = vunpack.c.l.b16 %v345
    %v432 = vunpack.c.l.b16 %v346
    %v433 = vunpack.c.l.b16 %v347
    %v434 = vunpack.c.l.b16 %v348
    %v435 = vunpack.c.l.b16 %v349
    %v436 = vunpack.c.l.b16 %v350
    %v437 = vunpack.c.l.b16 %v351
    %v438 = vunpack.c.l.b16 %v352
    %v439 = vunpack.c.l.b16 %v353
    %v440 = vunpack.c.l.b16 %v354
    %v441 = vunpack.c.l.b16 %v355
    %v442 = vunpack.c.l.b16 %v356
    %v443 = vunpack.c.l.b16 %v357
    %v444 = vunpack.c.l.b16 %v358
    %v445 = vunpack.c.l.b16 %v359
    %v446 = vpack.c.b16 %v431, %v430
    %v447 = vpack.c.b16 %v433, %v432
    %v448 = vpack.c.b16 %v435, %v434
    %v449 = vpack.c.b16 %v437, %v436
    %v450 = vpack.c.b16 %v439, %v438
    %v451 = vpack.c.b16 %v441, %v440
    %v452 = vpack.c.b16 %v443, %v442
    %v453 = vpack.c.b16 %v445, %v444
    %462 = vmatprep.subr.bf16.mxu0 0
    %463 = vmatpush1.bf16.msra.mxu0 %v453
    %464 = vmatprep.subr.bf16.mxu0 0
    %465 = vmatpush1.bf16.msra.mxu0 %v452
    %466 = vmatprep.subr.bf16.mxu0 0
    %467 = vmatpush1.bf16.msra.mxu0 %v451
    %468 = vmatprep.subr.bf16.mxu0 0
    %469 = vmatpush1.bf16.msra.mxu0 %v450
    %470 = vmatprep.subr.bf16.mxu0 0
    %471 = vmatpush1.bf16.msra.mxu0 %v449
    %472 = vmatprep.subr.bf16.mxu0 0
    %473 = vmatpush1.bf16.msra.mxu0 %v448
    %474 = vmatprep.subr.bf16.mxu0 0
    %475 = vmatpush1.bf16.msra.mxu0 %v447
    %476 = vmatprep.subr.bf16.mxu0 0
    %477 = vmatpush1.bf16.msra.mxu0 %v446
    %478 = vmatprep.subr.bf16.mxu0 0
    %479 = vmatpush2.bf16.msra.mxu0 0
    %480 = vmatprep.subr.bf16.mxu0 0
    %481 = vmatpush2.bf16.msra.mxu0 0
    %482 = vmatprep.subr.bf16.mxu0 0
    %483 = vmatpush2.bf16.msra.mxu0 0
    %484 = vmatprep.subr.bf16.mxu0 0
    %485 = vmatpush2.bf16.msra.mxu0 0
    %486 = vmatprep.subr.bf16.mxu0 0
    %487 = vmatpush2.bf16.msra.mxu0 0
    %488 = vmatprep.subr.bf16.mxu0 0
    %489 = vmatpush2.bf16.msra.mxu0 0
    %490 = vmatprep.subr.bf16.mxu0 0
    %491 = vmatpush2.bf16.msra.mxu0 0
    %492 = vmatprep.subr.bf16.mxu0 0
    %493 = vmatpush2.bf16.msra.mxu0 0
    %494 = vmatprep.mubr.bf16.mxu0 0
    %495 = vmatmul.mubr.bf16.gmra.mxu0 %v343
    %v496 = vpop.f32.mrf.mxu0
    %v497 = vadd.f32 %v408, %v496
    %v498 = vpop.f32.mrf.mxu0
    %v499 = vpop.f32.mrf.mxu0
    %v500 = vadd.f32 %v411, %v499
    %v501 = vpop.f32.mrf.mxu0
    %502 = vdwg.mxu0
    %v503 = vld [vmem:[%s5] sm:$0x1]
    %v505 = vlaneseq
    %v506 = vshrl.u32 %v505, 7
    %v507 = vsub.s32 0, %v506
    %v508 = vrot.slane %v503, %v507
    %v510 = vadd.f32 %v497, %v508
    %v511 = vadd.f32 %v500, %v508
    %v512 = vmin.f32 %v510, 20.0
    %v513 = vmin.f32 %v511, 20.0
    %v514 = vmul.f32 %v512, 1.442695
    %v515 = vpow.pop %v514
    %v516 = vmul.f32 %v513, 1.442695
    %v517 = vpow.pop %v516
    %v518 = vadd.f32 %v515, 2.0
    %v519 = vadd.f32 %v517, 2.0
    %v520 = vmul.f32 %v515, %v518
    %v521 = vmul.f32 %v517, %v519
    %v522 = vmul.f32 %v510, %v520
    %v523 = vmul.f32 %v511, %v521
    %v524 = vadd.f32 %v520, 2.0
    %v525 = vadd.f32 %v521, 2.0
    %v526 = vrcp.pop %v524
    %v527 = vrcp.pop %v525
    %v528 = vmul.f32 %v522, %v526
    %v529 = vmul.f32 %v523, %v527
    %v530 = vpack.c.bf16 %v529, %v528
    %v531 = vld [vmem:[#allocation8] sm:$0xf]
    %v532 = vld [vmem:[#allocation8 + $0x4] sm:$0xf]
    %v533 = vld [vmem:[#allocation8 + $0x8] sm:$0xf]
    %v534 = vld [vmem:[#allocation8 + $0xc] sm:$0xf]
    %v535 = vld [vmem:[#allocation8 + $0x10] sm:$0xf]
    %v536 = vld [vmem:[#allocation8 + $0x14] sm:$0xf]
    %v537 = vld [vmem:[#allocation8 + $0x18] sm:$0xf]
    %v538 = vld [vmem:[#allocation8 + $0x1c] sm:$0xf]
    %v539 = vld [vmem:[#allocation8 + $0x20] sm:$0xf]
    %v540 = vld [vmem:[#allocation8 + $0x24] sm:$0xf]
    %v541 = vld [vmem:[#allocation8 + $0x28] sm:$0xf]
    %v542 = vld [vmem:[#allocation8 + $0x2c] sm:$0xf]
    %v543 = vld [vmem:[#allocation8 + $0x30] sm:$0xf]
    %v544 = vld [vmem:[#allocation8 + $0x34] sm:$0xf]
    %v545 = vld [vmem:[#allocation8 + $0x38] sm:$0xf]
    %v546 = vld [vmem:[#allocation8 + $0x3c] sm:$0xf]
    %v547 = vld [vmem:[%s7] sm:$0x1]
    %v549 = vlaneseq
    %v550 = vshrl.u32 %v549, 7
    %v551 = vsub.s32 0, %v550
    %v552 = vrot.slane %v547, %v551
    %v570 = vunpack.c.l.b16 %v531
    %v571 = vunpack.c.l.b16 %v532
    %v572 = vunpack.c.l.b16 %v533
    %v573 = vunpack.c.l.b16 %v534
    %v574 = vunpack.c.l.b16 %v535
    %v575 = vunpack.c.l.b16 %v536
    %v576 = vunpack.c.l.b16 %v537
    %v577 = vunpack.c.l.b16 %v538
    %v578 = vunpack.c.l.b16 %v539
    %v579 = vunpack.c.l.b16 %v540
    %v580 = vunpack.c.l.b16 %v541
    %v581 = vunpack.c.l.b16 %v542
    %v582 = vunpack.c.l.b16 %v543
    %v583 = vunpack.c.l.b16 %v544
    %v584 = vunpack.c.l.b16 %v545
    %v585 = vunpack.c.l.b16 %v546
    %v586 = vpack.c.b16 %v571, %v570
    %v587 = vpack.c.b16 %v573, %v572
    %v588 = vpack.c.b16 %v575, %v574
    %v589 = vpack.c.b16 %v577, %v576
    %v590 = vpack.c.b16 %v579, %v578
    %v591 = vpack.c.b16 %v581, %v580
    %v592 = vpack.c.b16 %v583, %v582
    %v593 = vpack.c.b16 %v585, %v584
    %602 = vmatprep.subr.bf16.mxu0 0
    %603 = vmatpush1.bf16.msra.mxu0 %v593
    %604 = vmatprep.subr.bf16.mxu0 0
    %605 = vmatpush1.bf16.msra.mxu0 %v592
    %606 = vmatprep.subr.bf16.mxu0 0
    %607 = vmatpush1.bf16.msra.mxu0 %v591
    %608 = vmatprep.subr.bf16.mxu0 0
    %609 = vmatpush1.bf16.msra.mxu0 %v590
    %610 = vmatprep.subr.bf16.mxu0 0
    %611 = vmatpush1.bf16.msra.mxu0 %v589
    %612 = vmatprep.subr.bf16.mxu0 0
    %613 = vmatpush1.bf16.msra.mxu0 %v588
    %614 = vmatprep.subr.bf16.mxu0 0
    %615 = vmatpush1.bf16.msra.mxu0 %v587
    %616 = vmatprep.subr.bf16.mxu0 0
    %617 = vmatpush1.bf16.msra.mxu0 %v586
    %618 = vmatprep.subr.bf16.mxu0 0
    %619 = vmatpush2.bf16.msra.mxu0 0
    %620 = vmatprep.subr.bf16.mxu0 0
    %621 = vmatpush2.bf16.msra.mxu0 0
    %622 = vmatprep.subr.bf16.mxu0 0
    %623 = vmatpush2.bf16.msra.mxu0 0
    %624 = vmatprep.subr.bf16.mxu0 0
    %625 = vmatpush2.bf16.msra.mxu0 0
    %626 = vmatprep.subr.bf16.mxu0 0
    %627 = vmatpush2.bf16.msra.mxu0 0
    %628 = vmatprep.subr.bf16.mxu0 0
    %629 = vmatpush2.bf16.msra.mxu0 0
    %630 = vmatprep.subr.bf16.mxu0 0
    %631 = vmatpush2.bf16.msra.mxu0 0
    %632 = vmatprep.subr.bf16.mxu0 0
    %633 = vmatpush2.bf16.msra.mxu0 0
    %634 = vmatprep.mubr.bf16.mxu0 0
    %635 = vmatmul.mubr.bf16.gmra.mxu0 %v530
    %v636 = vpop.f32.mrf.mxu0
    %v637 = vadd.f32 %v552, %v636
    %v638 = vpop.f32.mrf.mxu0
    %v639 = vpop.f32.mrf.mxu0
    %v640 = vadd.f32 %v552, %v639
    %v641 = vpop.f32.mrf.mxu0
    %642 = vdwg.mxu0
    %v643 = vmin.f32 %v637, 20.0
    %v644 = vmin.f32 %v640, 20.0
    %v645 = vmul.f32 %v643, 1.442695
    %v646 = vpow.pop %v645
    %v647 = vmul.f32 %v644, 1.442695
    %v648 = vpow.pop %v647
    %v649 = vadd.f32 %v646, 2.0
    %v650 = vadd.f32 %v648, 2.0
    %v651 = vmul.f32 %v646, %v649
    %v652 = vmul.f32 %v648, %v650
    %v653 = vmul.f32 %v637, %v651
    %v654 = vmul.f32 %v640, %v652
    %v655 = vadd.f32 %v651, 2.0
    %v656 = vadd.f32 %v652, 2.0
    %v657 = vrcp.pop %v655
    %v658 = vrcp.pop %v656
    %v659 = vmul.f32 %v653, %v657
    %v660 = vmul.f32 %v654, %v658
    %v661 = vpack.c.bf16 %v660, %v659
    %v662 = vld [vmem:[#allocation10] sm:$0xf]
    %v663 = vld [vmem:[#allocation10 + $0x4] sm:$0xf]
    %v664 = vld [vmem:[#allocation10 + $0x8] sm:$0xf]
    %v665 = vld [vmem:[#allocation10 + $0xc] sm:$0xf]
    %v666 = vld [vmem:[#allocation10 + $0x10] sm:$0xf]
    %v667 = vld [vmem:[#allocation10 + $0x14] sm:$0xf]
    %v668 = vld [vmem:[#allocation10 + $0x18] sm:$0xf]
    %v669 = vld [vmem:[#allocation10 + $0x1c] sm:$0xf]
    %v670 = vld [vmem:[#allocation10 + $0x20] sm:$0xf]
    %v671 = vld [vmem:[#allocation10 + $0x24] sm:$0xf]
    %v672 = vld [vmem:[#allocation10 + $0x28] sm:$0xf]
    %v673 = vld [vmem:[#allocation10 + $0x2c] sm:$0xf]
    %v674 = vld [vmem:[#allocation10 + $0x30] sm:$0xf]
    %v675 = vld [vmem:[#allocation10 + $0x34] sm:$0xf]
    %v676 = vld [vmem:[#allocation10 + $0x38] sm:$0xf]
    %v677 = vld [vmem:[#allocation10 + $0x3c] sm:$0xf]
    %v678 = vld [vmem:[%s9] sm:$0x1]
    %v680 = vlaneseq
    %v681 = vshrl.u32 %v680, 7
    %v682 = vsub.s32 0, %v681
    %v683 = vrot.slane %v678, %v682
    %v701 = vunpack.c.l.b16 %v662
    %v702 = vunpack.c.l.b16 %v663
    %v703 = vunpack.c.l.b16 %v664
    %v704 = vunpack.c.l.b16 %v665
    %v705 = vunpack.c.l.b16 %v666
    %v706 = vunpack.c.l.b16 %v667
    %v707 = vunpack.c.l.b16 %v668
    %v708 = vunpack.c.l.b16 %v669
    %v709 = vunpack.c.l.b16 %v670
    %v710 = vunpack.c.l.b16 %v671
    %v711 = vunpack.c.l.b16 %v672
    %v712 = vunpack.c.l.b16 %v673
    %v713 = vunpack.c.l.b16 %v674
    %v714 = vunpack.c.l.b16 %v675
    %v715 = vunpack.c.l.b16 %v676
    %v716 = vunpack.c.l.b16 %v677
    %v717 = vpack.c.b16 %v702, %v701
    %v718 = vpack.c.b16 %v704, %v703
    %v719 = vpack.c.b16 %v706, %v705
    %v720 = vpack.c.b16 %v708, %v707
    %v721 = vpack.c.b16 %v710, %v709
    %v722 = vpack.c.b16 %v712, %v711
    %v723 = vpack.c.b16 %v714, %v713
    %v724 = vpack.c.b16 %v716, %v715
    %733 = vmatprep.subr.bf16.mxu0 0
    %734 = vmatpush1.bf16.msra.mxu0 %v724
    %735 = vmatprep.subr.bf16.mxu0 0
    %736 = vmatpush1.bf16.msra.mxu0 %v723
    %737 = vmatprep.subr.bf16.mxu0 0
    %738 = vmatpush1.bf16.msra.mxu0 %v722
    %739 = vmatprep.subr.bf16.mxu0 0
    %740 = vmatpush1.bf16.msra.mxu0 %v721
    %741 = vmatprep.subr.bf16.mxu0 0
    %742 = vmatpush1.bf16.msra.mxu0 %v720
    %743 = vmatprep.subr.bf16.mxu0 0
    %744 = vmatpush1.bf16.msra.mxu0 %v719
    %745 = vmatprep.subr.bf16.mxu0 0
    %746 = vmatpush1.bf16.msra.mxu0 %v718
    %747 = vmatprep.subr.bf16.mxu0 0
    %748 = vmatpush1.bf16.msra.mxu0 %v717
    %749 = vmatprep.subr.bf16.mxu0 0
    %750 = vmatpush2.bf16.msra.mxu0 0
    %751 = vmatprep.subr.bf16.mxu0 0
    %752 = vmatpush2.bf16.msra.mxu0 0
    %753 = vmatprep.subr.bf16.mxu0 0
    %754 = vmatpush2.bf16.msra.mxu0 0
    %755 = vmatprep.subr.bf16.mxu0 0
    %756 = vmatpush2.bf16.msra.mxu0 0
    %757 = vmatprep.subr.bf16.mxu0 0
    %758 = vmatpush2.bf16.msra.mxu0 0
    %759 = vmatprep.subr.bf16.mxu0 0
    %760 = vmatpush2.bf16.msra.mxu0 0
    %761 = vmatprep.subr.bf16.mxu0 0
    %762 = vmatpush2.bf16.msra.mxu0 0
    %763 = vmatprep.subr.bf16.mxu0 0
    %764 = vmatpush2.bf16.msra.mxu0 0
    %765 = vmatprep.mubr.bf16.mxu0 0
    %766 = vmatmul.mubr.bf16.gmra.mxu0 %v661
    %v767 = vpop.f32.mrf.mxu0
    %v768 = vadd.f32 %v683, %v767
    %v769 = vpop.f32.mrf.mxu0
    %v770 = vpop.f32.mrf.mxu0
    %v771 = vadd.f32 %v683, %v770
    %v772 = vpop.f32.mrf.mxu0
    %773 = vdwg.mxu0
    %774 = vst [vmem:[#allocation11] sm:$0xff] %v768
    %775 = vst [vmem:[#allocation11 + $0x8] sm:$0xff] %v771
    // Predicated region
    $region62: #{tpu_custom_call.1} parent=1 // pred_check
      _
    $region63: #{tpu_custom_call.1} parent=1 // pred_check_branch
      %777 = sbr.rel (0) target = $region65
    $region64: #{tpu_custom_call.1} parent=1 // pred_region
      %s779 = ssub.s32 256, 256
      %780 = vsyncadd [#allocation4], %s779
      %s781 = sshll.u32 [#allocation11], 4
      %s782 = int_to_ptr.vmem [resolvable:$true] %s781
      %787 = dma.vmem_to_hbm [thread:$0]  %s782, 256, %s10, [#allocation4], 128, 128, 8
    $region65: #{tpu_custom_call.1} parent=1 // pred_fallthru
      _
    // Predicated region
    $region66: #{tpu_custom_call.1} parent=1 // pred_check
      _
    $region67: #{tpu_custom_call.1} parent=1 // pred_check_branch
      %789 = sbr.rel (0) target = $region69
    $region68: #{tpu_custom_call.1} parent=1 // pred_region
      %790 = dma.done [#allocation4], 256
    $region69: #{tpu_custom_call.1} parent=1 // pred_fallthru
      _
    %791 = vsyncpa [#allocation3], 1
    %792 = vsyncpa [#allocation6], 1
    %793 = vsyncpa [#allocation9], 1
    %794 = vsyncpa [#allocation4], 1

</llo_original>
